<compile_context>
chip_gen: v7x
topology: tpu7x:2x2x1
jax: 0.10.0
libtpu: 0.0.40
codegen_flags: <defaults>
</compile_context>

<pallas_src>
import jax
import jax.numpy as jnp
from jax.experimental import pallas as pl
from jax.experimental.pallas import tpu as pltpu


# --------------------------------------------------------------------------- #
# Kernel:  acc += x_tile @ W2_tile ; on last k:  o = relu(acc + b2) @ W3 + b3
# --------------------------------------------------------------------------- #
def decoder_mlp_kernel(x_ref, w2_ref, b2_ref, w3_ref, b3_ref, o_ref, acc_ref):
    k = pl.program_id(1)

    @pl.when(k == 0)
    def _():
        acc_ref[...] = jnp.zeros_like(acc_ref)

    # First linear layer, accumulated in f32 across the K (din) grid axis.
    acc_ref[...] += jnp.dot(
        x_ref[...], w2_ref[...], preferred_element_type=jnp.float32
    )

    @pl.when(k == pl.num_programs(1) - 1)
    def _():
        # Epilogue in f32 (bias + ReLU), second matmul fed at compute dtype.
        h = jnp.maximum(acc_ref[...] + b2_ref[...], 0.0)
        y = jnp.dot(
            h.astype(w3_ref.dtype), w3_ref[...], preferred_element_type=jnp.float32
        )
        o_ref[...] = (y + b3_ref[...]).astype(o_ref.dtype)


# --------------------------------------------------------------------------- #
# Host-side helpers
# --------------------------------------------------------------------------- #
def _round_up(x, n):
    return -(-x // n) * n


def _pick_tiles(m, din_p, hid_p, dout_p, x_bytes, w_bytes, out_bytes,
                budget_bytes=20 * (1 << 20)):
    """Choose (TM, TK) so the working set fits a conservative VMEM budget."""
    # K tile over din: keep the whole reduction unless din is very large.
    if din_p <= 1024:
        tk = din_p
    elif din_p % 512 == 0:
        tk = 512
    elif din_p % 256 == 0:
        tk = 256
    else:
        tk = 128

    def vmem_estimate(tm):
        return (2 * tm * tk * x_bytes            # double-buffered activation tile
                + 2 * tm * dout_p * out_bytes    # double-buffered output tile
                + 2 * tk * hid_p * w_bytes       # w2 tile (changes with k)
                + 2 * hid_p * dout_p * w_bytes   # w3 (resident; 2x worst case)
                + 2 * (hid_p + dout_p) * 4       # biases
                + tm * hid_p * 4                 # f32 accumulator scratch
                + tm * (hid_p + dout_p) * 4)     # live epilogue temps

    tm = 8
    for cand in (1024, 512, 256, 128, 64, 32, 16, 8):
        if vmem_estimate(cand) <= budget_bytes:
            tm = cand
            break

    # Don't pick a row tile far larger than the actual number of rows.
    while tm > 8 and tm >= 2 * _round_up(m, 8):
        tm //= 2
    # Megacore: ensure >=2 row tiles when there is enough work so both v7x
    # TensorCores get a share; cost on single-core chips is one extra grid step.
    while tm > 8 and -(-m // tm) < 2:
        tm //= 2

    return tm, tk, vmem_estimate(tm)


def eegformer_decoder_forward(x, fc2_w, fc2_b, fc3_w, fc3_b,
                              *, compute_dtype=jnp.bfloat16):
    """x: (..., input_dim) -> (..., output_dim); matches
    nn.Linear(input_dim, hidden) -> ReLU -> nn.Linear(hidden, output_dim)."""
    *lead, din = x.shape
    m = 1
    for d in lead:
        m *= d
    hid = fc2_w.shape[0]
    dout = fc3_w.shape[0]

    # Lane-dense padded feature dims (multiples of 128).
    din_p = _round_up(din, 128)
    hid_p = _round_up(hid, 128)
    dout_p = _round_up(dout, 128)

    # One-time host prep: transpose, zero-pad, cast to the MXU feed dtype.
    # Zero-padded weight rows/cols and zero bias entries are mathematically inert.
    w2 = jnp.pad(fc2_w.T, ((0, din_p - din), (0, hid_p - hid))).astype(compute_dtype)
    w3 = jnp.pad(fc3_w.T, ((0, hid_p - hid), (0, dout_p - dout))).astype(compute_dtype)
    b2 = jnp.pad(fc2_b, (0, hid_p - hid)).astype(jnp.float32).reshape(1, hid_p)
    b3 = jnp.pad(fc3_b, (0, dout_p - dout)).astype(jnp.float32).reshape(1, dout_p)

    out_dtype = x.dtype
    x_bytes = jnp.dtype(compute_dtype).itemsize
    w_bytes = jnp.dtype(compute_dtype).itemsize
    out_bytes = jnp.dtype(out_dtype).itemsize

    tm, tk, est_bytes = _pick_tiles(m, din_p, hid_p, dout_p,
                                    x_bytes, w_bytes, out_bytes)
    m_pad = _round_up(max(m, 1), tm)

    xf = x.reshape(m, din)
    xf = jnp.pad(xf, ((0, m_pad - m), (0, din_p - din))).astype(compute_dtype)

    grid = (m_pad // tm, din_p // tk)

    flops = 2 * m_pad * din_p * hid_p + 2 * m_pad * hid_p * dout_p
    bytes_accessed = (m_pad * din_p * x_bytes
                      + din_p * hid_p * w_bytes + hid_p * dout_p * w_bytes
                      + (hid_p + dout_p) * 4
                      + m_pad * dout_p * out_bytes)

    vmem_limit = int(min(max(2 * est_bytes, 16 * (1 << 20)), 48 * (1 << 20)))

    out = pl.pallas_call(
        decoder_mlp_kernel,
        out_shape=jax.ShapeDtypeStruct((m_pad, dout_p), out_dtype),
        grid=grid,
        in_specs=[
            pl.BlockSpec((tm, tk), lambda i, k: (i, k)),        # activation tile
            pl.BlockSpec((tk, hid_p), lambda i, k: (k, 0)),     # W2 K-tile
            # Constant-index blocks: Mosaic keeps them resident across steps.
            pl.BlockSpec((1, hid_p), lambda i, k: (0, 0)),      # b2
            pl.BlockSpec((hid_p, dout_p), lambda i, k: (0, 0)), # W3
            pl.BlockSpec((1, dout_p), lambda i, k: (0, 0)),     # b3
        ],
        out_specs=pl.BlockSpec((tm, dout_p), lambda i, k: (i, 0)),
        scratch_shapes=[pltpu.VMEM((tm, hid_p), jnp.float32)],
        compiler_params=pltpu.CompilerParams(
            dimension_semantics=("parallel", "arbitrary"),
            vmem_limit_bytes=vmem_limit,
        ),
        cost_estimate=pl.CostEstimate(
            flops=flops, transcendentals=0, bytes_accessed=bytes_accessed),
    )(xf, w2, b2, w3, b3)

    return out[:m, :dout].reshape(*lead, dout)


# --------------------------------------------------------------------------- #
# Pure-JAX reference (mirrors torch: y = relu(x @ W2.T + b2) @ W3.T + b3)
# --------------------------------------------------------------------------- #
def reference_forward(x, fc2_w, fc2_b, fc3_w, fc3_b):
    h = jnp.maximum(x @ fc2_w.T + fc2_b, 0.0)
    return h @ fc3_w.T + fc3_b


# --------------------------------------------------------------------------- #
if __name__ == "__main__":
    # Small shapes consistent with the module's forward contract:
    # x has arbitrary leading dims and a trailing feature dim = input_dim.
    batch, n_channels, seq = 2, 4, 16
    input_dim, hidden_dim, output_dim = 32, 64, 16

    key = jax.random.PRNGKey(0)
    kx, k2w, k2b, k3w, k3b = jax.random.split(key, 5)
    x = jax.random.normal(kx, (batch, n_channels, seq, input_dim), jnp.float32)
    fc2_w = 0.1 * jax.random.normal(k2w, (hidden_dim, input_dim), jnp.float32)
    fc2_b = 0.1 * jax.random.normal(k2b, (hidden_dim,), jnp.float32)
    fc3_w = 0.1 * jax.random.normal(k3w, (output_dim, hidden_dim), jnp.float32)
    fc3_b = 0.1 * jax.random.normal(k3b, (output_dim,), jnp.float32)

    out = eegformer_decoder_forward(x, fc2_w, fc2_b, fc3_w, fc3_b)
    out = jax.block_until_ready(out)

    ref = jax.block_until_ready(reference_forward(x, fc2_w, fc2_b, fc3_w, fc3_b))
    assert out.shape == (batch, n_channels, seq, output_dim), out.shape
    # bf16 MXU feed with f32 accumulation -> loosened tolerance.
    assert jnp.allclose(out, ref, rtol=2e-2, atol=2e-2), \
        float(jnp.max(jnp.abs(out - ref)))

    print("KERNEL_OK")
</pallas_src>

<mosaic_0001>
module attributes {stable_mosaic.version = 11 : i64} {
  func.func @decoder_mlp_kernel(%arg0: i32, %arg1: i32, %arg2: memref<64x128xbf16, #tpu.memory_space<vmem>>, %arg3: memref<128x128xbf16, #tpu.memory_space<vmem>>, %arg4: memref<1x128xf32, #tpu.memory_space<vmem>>, %arg5: memref<128x128xbf16, #tpu.memory_space<vmem>>, %arg6: memref<1x128xf32, #tpu.memory_space<vmem>>, %arg7: memref<64x128xf32, #tpu.memory_space<vmem>>, %arg8: memref<64x128xf32, #tpu.memory_space<vmem>>) attributes {dimension_semantics = [#tpu.dimension_semantics<parallel>, #tpu.dimension_semantics<arbitrary>], iteration_bounds = array<i64: 2, 1>, scalar_prefetch = 0 : i64, scratch_operands = 1 : i64, tpu.core_type = #tpu.core_type<tc>, window_params = [{transform_indices = @transform_0, window_bounds = array<i64: 64, 128>}, {transform_indices = @transform_1, window_bounds = array<i64: 128, 128>}, {pipeline_mode = #tpu.pipeline_mode<synchronous>, transform_indices = @transform_2, window_bounds = array<i64: 1, 128>}, {pipeline_mode = #tpu.pipeline_mode<synchronous>, transform_indices = @transform_3, window_bounds = array<i64: 128, 128>}, {pipeline_mode = #tpu.pipeline_mode<synchronous>, transform_indices = @transform_4, window_bounds = array<i64: 1, 128>}, {transform_indices = @transform_5, window_bounds = array<i64: 64, 128>}]} {
    %c0_i32 = arith.constant 0 : i32
    %0 = arith.cmpi eq, %arg1, %c0_i32 : i32
    %1 = arith.extui %0 : i1 to i32
    %c0_i32_0 = arith.constant 0 : i32
    %2 = arith.cmpi ne, %1, %c0_i32_0 : i32
    scf.if %2 {
      %cst_10 = arith.constant 0.000000e+00 : f32
      %12 = vector.broadcast %cst_10 : f32 to vector<64x128xf32>
      %c0_11 = arith.constant 0 : index
      %c0_12 = arith.constant 0 : index
      %13 = vector.load %arg8[%c0_11, %c0_12] : memref<64x128xf32, #tpu.memory_space<vmem>>, vector<64x128xf32>
      tpu.vector_store %arg8[%c0_11, %c0_12], %12 {strides = array<i32>} : memref<64x128xf32, #tpu.memory_space<vmem>>, vector<64x128xf32>,
    } else {
    }
    %c0 = arith.constant 0 : index
    %c0_1 = arith.constant 0 : index
    %3 = vector.load %arg8[%c0, %c0_1] : memref<64x128xf32, #tpu.memory_space<vmem>>, vector<64x128xf32>
    %c0_2 = arith.constant 0 : index
    %c0_3 = arith.constant 0 : index
    %4 = vector.load %arg2[%c0_2, %c0_3] : memref<64x128xbf16, #tpu.memory_space<vmem>>, vector<64x128xbf16>
    %c0_4 = arith.constant 0 : index
    %c0_5 = arith.constant 0 : index
    %5 = vector.load %arg3[%c0_4, %c0_5] : memref<128x128xbf16, #tpu.memory_space<vmem>>, vector<128x128xbf16>
    %cst = arith.constant dense<0.000000e+00> : vector<64x128xf32>
    %6 = tpu.matmul %4, %5, %cst {dimension_numbers = #tpu.dot_dimension_numbers<[1], [0], [0], [1], [0, 0, 1, 1], [], []>} : vector<64x128xbf16>, vector<128x128xbf16>, vector<64x128xf32> -> vector<64x128xf32>
    %7 = arith.addf %3, %6 : vector<64x128xf32>
    %c0_6 = arith.constant 0 : index
    %c0_7 = arith.constant 0 : index
    %8 = vector.load %arg8[%c0_6, %c0_7] : memref<64x128xf32, #tpu.memory_space<vmem>>, vector<64x128xf32>
    tpu.vector_store %arg8[%c0_6, %c0_7], %7 {strides = array<i32>} : memref<64x128xf32, #tpu.memory_space<vmem>>, vector<64x128xf32>,
    %c0_i32_8 = arith.constant 0 : i32
    %9 = arith.cmpi eq, %arg1, %c0_i32_8 : i32
    %10 = arith.extui %9 : i1 to i32
    %c0_i32_9 = arith.constant 0 : i32
    %11 = arith.cmpi ne, %10, %c0_i32_9 : i32
    scf.if %11 {
      %c0_10 = arith.constant 0 : index
      %c0_11 = arith.constant 0 : index
      %12 = vector.load %arg8[%c0_10, %c0_11] : memref<64x128xf32, #tpu.memory_space<vmem>>, vector<64x128xf32>
      %c0_12 = arith.constant 0 : index
      %c0_13 = arith.constant 0 : index
      %13 = vector.load %arg4[%c0_12, %c0_13] : memref<1x128xf32, #tpu.memory_space<vmem>>, vector<1x128xf32>
      %14 = vector.broadcast %13 : vector<1x128xf32> to vector<64x128xf32>
      %15 = arith.addf %12, %14 : vector<64x128xf32>
      %cst_14 = arith.constant 0.000000e+00 : f32
      %16 = vector.broadcast %cst_14 : f32 to vector<64x128xf32>
      %17 = arith.maximumf %15, %16 : vector<64x128xf32>
      %18 = arith.truncf %17 : vector<64x128xf32> to vector<64x128xbf16>
      %c0_15 = arith.constant 0 : index
      %c0_16 = arith.constant 0 : index
      %19 = vector.load %arg5[%c0_15, %c0_16] : memref<128x128xbf16, #tpu.memory_space<vmem>>, vector<128x128xbf16>
      %cst_17 = arith.constant dense<0.000000e+00> : vector<64x128xf32>
      %20 = tpu.matmul %18, %19, %cst_17 {dimension_numbers = #tpu.dot_dimension_numbers<[1], [0], [0], [1], [0, 0, 1, 1], [], []>} : vector<64x128xbf16>, vector<128x128xbf16>, vector<64x128xf32> -> vector<64x128xf32>
      %c0_18 = arith.constant 0 : index
      %c0_19 = arith.constant 0 : index
      %21 = vector.load %arg6[%c0_18, %c0_19] : memref<1x128xf32, #tpu.memory_space<vmem>>, vector<1x128xf32>
      %22 = vector.broadcast %21 : vector<1x128xf32> to vector<64x128xf32>
      %23 = arith.addf %20, %22 : vector<64x128xf32>
      %c0_20 = arith.constant 0 : index
      %c0_21 = arith.constant 0 : index
      %24 = vector.load %arg7[%c0_20, %c0_21] : memref<64x128xf32, #tpu.memory_space<vmem>>, vector<64x128xf32>
      tpu.vector_store %arg7[%c0_20, %c0_21], %23 {strides = array<i32>} : memref<64x128xf32, #tpu.memory_space<vmem>>, vector<64x128xf32>,
    } else {
    }
    return
  }
  func.func @transform_0(%arg0: i32, %arg1: i32) -> (i32, i32) {
    %c0_i32 = arith.constant 0 : i32
    return %arg0, %arg1 : i32, i32
  }
  func.func @transform_1(%arg0: i32, %arg1: i32) -> (i32, i32) {
    %c0_i32 = arith.constant 0 : i32
    %c0_i32_0 = arith.constant 0 : i32
    return %arg1, %c0_i32 : i32, i32
  }
  func.func @transform_2(%arg0: i32, %arg1: i32) -> (i32, i32) {
    %c0_i32 = arith.constant 0 : i32
    %c0_i32_0 = arith.constant 0 : i32
    %c0_i32_1 = arith.constant 0 : i32
    return %c0_i32, %c0_i32_0 : i32, i32
  }
  func.func @transform_3(%arg0: i32, %arg1: i32) -> (i32, i32) {
    %c0_i32 = arith.constant 0 : i32
    %c0_i32_0 = arith.constant 0 : i32
    %c0_i32_1 = arith.constant 0 : i32
    return %c0_i32, %c0_i32_0 : i32, i32
  }
  func.func @transform_4(%arg0: i32, %arg1: i32) -> (i32, i32) {
    %c0_i32 = arith.constant 0 : i32
    %c0_i32_0 = arith.constant 0 : i32
    %c0_i32_1 = arith.constant 0 : i32
    return %c0_i32, %c0_i32_0 : i32, i32
  }
  func.func @transform_5(%arg0: i32, %arg1: i32) -> (i32, i32) {
    %c0_i32 = arith.constant 0 : i32
    %c0_i32_0 = arith.constant 0 : i32
    return %arg0, %c0_i32 : i32, i32
  }
}

</mosaic_0001>

<llo_original>
// kernel: tpu_custom_call.1
$region0: #{tpu_custom_call.1}
  #allocation0 [shape = 'u32[]', space=smem, size = 0x4, offset = 0x4, fixed_abs, tag = 'smem constant byte address 0x4 - core index']
  #allocation1 [shape = 'u32[144,128]{1,0:T(1,128)}', space=vmem, size = 0x12000, scoped, tag = 'internal scratch']
  #allocation2 [shape = 'f32[64,128]{1,0:T(8,128)}', space=vmem, size = 0x8000, scoped, tag = 'scratch operand']
  %s0 = inlined_call_operand.hbm [shape: bf16[128,128], index: 0, kind: input, shape index: {}]
  %s1 = inlined_call_operand.hbm [shape: bf16[128,128], index: 1, kind: input, shape index: {}]
  %s2 = inlined_call_operand.vmem [shape: f32[1,128], index: 2, kind: input, shape index: {}]
  %s3 = inlined_call_operand.hbm [shape: bf16[128,128], index: 3, kind: input, shape index: {}]
  %s4 = inlined_call_operand.vmem [shape: f32[1,128], index: 4, kind: input, shape index: {}]
  %s5 = inlined_call_operand.hbm [shape: f32[128,128], index: 5, kind: output, shape index: {}]
  %s6 = sld [smem:[#allocation0]]
  $region73: #{tpu_custom_call.1} parent=0
    _
  %s8 = ssub.s32 1, %s6
  %s9 = scalar_select 0, %s8, %s6
  $region1: #{tpu_custom_call.1} parent=0
    #allocation3 [shape = 'u8[32768]{0}', space=vmem, size = 0x8000, scoped, tag = 'input window, operand 0']
    #allocation4 [shape = 's32[2]{0}', space=sflag, size = 0x8, scoped, tag = 'scoped memory for tpu_custom_call.1']
    #allocation5 [shape = 's32[2]{0}', space=sflag, size = 0x8, scoped, tag = 'scoped memory for tpu_custom_call.1']
    #allocation6 [shape = 'u8[32768]{0}', space=vmem, size = 0x8000, scoped, tag = 'input window, operand 1, single buffered']
    #allocation7 [shape = 's32[1]{0}', space=sflag, size = 0x4, scoped, tag = 'scoped memory for tpu_custom_call.1']
    #allocation8 [shape = 'u8[32768]{0}', space=vmem, size = 0x8000, scoped, tag = 'input window, operand 3, single buffered']
    #allocation9 [shape = 'u8[65536]{0}', space=vmem, size = 0x10000, scoped, tag = 'output window, operand 0']
    %10 = vsyncpa [#allocation4], 0
    %s11 = scalar_lea.sflag [#allocation4], 1
    %12 = vsyncpa %s11, 0
    %13 = vsyncpa [#allocation7], 0
    %14 = vsyncpa [#allocation5], 0
    %s15 = scalar_lea.sflag [#allocation5], 1
    %16 = vsyncpa %s15, 0
    loop: start=0, step=1, limit=4
    $region2: #{tpu_custom_call.1} parent=1 // loop_pre_header
      _
    $region3: #{tpu_custom_call.1} parent=1 // loop_header
      %s18 = sphi 0, %s22
      %p19 = scmp.ge.s32.totalorder %s18, 4
      %s25 = sphi 0, %s37
      %s26 = sphi 0, %s33
      %s27 = sphi 0, %s25
      %s28 = sphi 0, %s26
      %s29 = sphi 0, %s27
      %s30 = sphi 0, %s28
      %s42 = sphi 0, %s44
      %s45 = sphi 0, %s42
      %s46 = sphi 0, %s45
      %s62 = sphi 0, %s46
      %s68 = sphi 0, %s70
      %s71 = sphi 0, %s68
      %s72 = sphi 0, %s71
      %s88 = sphi 0, %s72
      %s92 = sphi 0, %s92
      %s94 = sphi 0, %s92
      %s95 = sphi 0, %s94
      %s109 = sphi 0, %s95
      %s113 = sphi 0, %s113
      %s115 = sphi 0, %s113
      %s116 = sphi 0, %s115
      %s130 = sphi 0, %s116
      %s134 = sphi 0, %s134
      %s136 = sphi 0, %s134
      %s137 = sphi 0, %s136
      %s151 = sphi 0, %s137
      %s157 = sphi 0, %s159
      %s160 = sphi 0, %s157
      %s161 = sphi 0, %s160
      %s177 = sphi 0, %s161
    $region4: #{tpu_custom_call.1} parent=1 // loop_header_branch
      %21 = sbr.rel (%p19) target = $region8
    $region5: #{tpu_custom_call.1} parent=1 // loop_body
      %s23 = ssub.s32 %s18, 1
      %s24 = ssub.s32 %s18, 2
      %s31 = sadd.s32 1, %s26
      %p32 = scmp.ge.s32.totalorder %s31, 1
      %s33 = scalar_select %p32, 0, %s31
      %s34 = sadd.s32 1, %s25
      %s35 = scalar_select %p32, %s34, %s25
      %p36 = scmp.ge.s32.totalorder %s35, 2
      %s37 = scalar_select %p36, 0, %s35
      %s38 = ssub.s32 %s25, %s37
      %s39 = ssub.s32 %s26, %s33
      %s40 = sor.u32 %s38, %s39
      %p41 = scmp.eq.s32.totalorder %s40, 0
      %s43 = sadd.s32 %s42, 1
      %s44 = scalar_select %p41, %s42, %s43
      %p47 = pneg %p41
      %p48 = scmp.eq.s32.totalorder %s18, 1
      %p49 = por %p47, %p48
      %p50 = scmp.ne.s32.totalorder %s42, %s45
      %p51 = scmp.eq.s32.totalorder %s18, 0
      %p52 = por %p50, %p51
      %p53 = scmp.ne.s32.totalorder %s42, %s45
      %p54 = scmp.eq.s32.totalorder %s23, 1
      %p55 = por %p53, %p54
      %p56 = scmp.ne.s32.totalorder %s45, %s46
      %p57 = scmp.eq.s32.totalorder %s23, 0
      %p58 = por %p56, %p57
      %p59 = scmp.ne.s32.totalorder %s45, %s46
      %p60 = scmp.eq.s32.totalorder %s24, 1
      %p61 = por %p59, %p60
      %p63 = scmp.ne.s32.totalorder %s46, %s62
      %p64 = scmp.eq.s32.totalorder %s24, 0
      %p65 = por %p63, %p64
      %s66 = ssub.s32 %s26, %s33
      %p67 = scmp.eq.s32.totalorder %s66, 0
      %s69 = sadd.s32 %s68, 1
      %s70 = scalar_select %p67, %s68, %s69
      %p73 = pneg %p67
      %p74 = scmp.eq.s32.totalorder %s18, 1
      %p75 = por %p73, %p74
      %p76 = scmp.ne.s32.totalorder %s68, %s71
      %p77 = scmp.eq.s32.totalorder %s18, 0
      %p78 = por %p76, %p77
      %p79 = scmp.ne.s32.totalorder %s68, %s71
      %p80 = scmp.eq.s32.totalorder %s23, 1
      %p81 = por %p79, %p80
      %p82 = scmp.ne.s32.totalorder %s71, %s72
      %p83 = scmp.eq.s32.totalorder %s23, 0
      %p84 = por %p82, %p83
      %p85 = scmp.ne.s32.totalorder %s71, %s72
      %p86 = scmp.eq.s32.totalorder %s24, 1
      %p87 = por %p85, %p86
      %p89 = scmp.ne.s32.totalorder %s72, %s88
      %p90 = scmp.eq.s32.totalorder %s24, 0
      %p91 = por %p89, %p90
      %s93 = sadd.s32 %s92, 1
      %p96 = scmp.eq.s32.totalorder %s18, 1
      %p97 = scmp.ne.s32.totalorder %s92, %s94
      %p98 = scmp.eq.s32.totalorder %s18, 0
      %p99 = por %p97, %p98
      %p100 = scmp.ne.s32.totalorder %s92, %s94
      %p101 = scmp.eq.s32.totalorder %s23, 1
      %p102 = por %p100, %p101
      %p103 = scmp.ne.s32.totalorder %s94, %s95
      %p104 = scmp.eq.s32.totalorder %s23, 0
      %p105 = por %p103, %p104
      %p106 = scmp.ne.s32.totalorder %s94, %s95
      %p107 = scmp.eq.s32.totalorder %s24, 1
      %p108 = por %p106, %p107
      %p110 = scmp.ne.s32.totalorder %s95, %s109
      %p111 = scmp.eq.s32.totalorder %s24, 0
      %p112 = por %p110, %p111
      %s114 = sadd.s32 %s113, 1
      %p117 = scmp.eq.s32.totalorder %s18, 1
      %p118 = scmp.ne.s32.totalorder %s113, %s115
      %p119 = scmp.eq.s32.totalorder %s18, 0
      %p120 = por %p118, %p119
      %p121 = scmp.ne.s32.totalorder %s113, %s115
      %p122 = scmp.eq.s32.totalorder %s23, 1
      %p123 = por %p121, %p122
      %p124 = scmp.ne.s32.totalorder %s115, %s116
      %p125 = scmp.eq.s32.totalorder %s23, 0
      %p126 = por %p124, %p125
      %p127 = scmp.ne.s32.totalorder %s115, %s116
      %p128 = scmp.eq.s32.totalorder %s24, 1
      %p129 = por %p127, %p128
      %p131 = scmp.ne.s32.totalorder %s116, %s130
      %p132 = scmp.eq.s32.totalorder %s24, 0
      %p133 = por %p131, %p132
      %s135 = sadd.s32 %s134, 1
      %p138 = scmp.eq.s32.totalorder %s18, 1
      %p139 = scmp.ne.s32.totalorder %s134, %s136
      %p140 = scmp.eq.s32.totalorder %s18, 0
      %p141 = por %p139, %p140
      %p142 = scmp.ne.s32.totalorder %s134, %s136
      %p143 = scmp.eq.s32.totalorder %s23, 1
      %p144 = por %p142, %p143
      %p145 = scmp.ne.s32.totalorder %s136, %s137
      %p146 = scmp.eq.s32.totalorder %s23, 0
      %p147 = por %p145, %p146
      %p148 = scmp.ne.s32.totalorder %s136, %s137
      %p149 = scmp.eq.s32.totalorder %s24, 1
      %p150 = por %p148, %p149
      %p152 = scmp.ne.s32.totalorder %s137, %s151
      %p153 = scmp.eq.s32.totalorder %s24, 0
      %p154 = por %p152, %p153
      %s155 = ssub.s32 %s25, %s37
      %p156 = scmp.eq.s32.totalorder %s155, 0
      %s158 = sadd.s32 %s157, 1
      %s159 = scalar_select %p156, %s157, %s158
      %p162 = pneg %p156
      %p163 = scmp.eq.s32.totalorder %s18, 1
      %p164 = por %p162, %p163
      %p165 = scmp.ne.s32.totalorder %s157, %s160
      %p166 = scmp.eq.s32.totalorder %s18, 0
      %p167 = por %p165, %p166
      %p168 = scmp.ne.s32.totalorder %s157, %s160
      %p169 = scmp.eq.s32.totalorder %s23, 1
      %p170 = por %p168, %p169
      %p171 = scmp.ne.s32.totalorder %s160, %s161
      %p172 = scmp.eq.s32.totalorder %s23, 0
      %p173 = por %p171, %p172
      %p174 = scmp.ne.s32.totalorder %s160, %s161
      %p175 = scmp.eq.s32.totalorder %s24, 1
      %p176 = por %p174, %p175
      %p178 = scmp.ne.s32.totalorder %s161, %s177
      %p179 = scmp.eq.s32.totalorder %s24, 0
      %p180 = por %p178, %p179
      %p181 = scmp.le.s32.totalorder 1, %s18
      %p182 = scmp.lt.s32.totalorder %s18, 3
      %p183 = pnand %p181, %p182
      %p184 = pneg %p183
      // Predicated region
      $region9: #{tpu_custom_call.1} parent=5 // pred_check
        _
      $region10: #{tpu_custom_call.1} parent=5 // pred_check_branch
        %186 = sbr.rel (%p183) target = $region12
      $region11: #{tpu_custom_call.1} parent=5 // pred_region
        %s187 = ssub.s32 %s18, 1
        // Predicated region
        $region13: #{tpu_custom_call.1} parent=11 // pred_check
          %p188 = pneg %p84
        $region14: #{tpu_custom_call.1} parent=11 // pred_check_branch
          %190 = sbr.rel (%p188) target = $region16
        $region15: #{tpu_custom_call.1} parent=11 // pred_region
          %s191 = smul.u32 16, %s28
          %s193 = ssub.s32 1024, 1024
          %194 = vsyncadd [#allocation7], %s193
          %s195 = smul.addr %s191, 64
          %s196 = scalar_lea.hbm %s1, %s195
          %s197 = sshll.u32 [#allocation6], 4
          %s198 = int_to_ptr.vmem [resolvable:$true] %s197
          %203 = dma.hbm_to_vmem [thread:$0]  %s196, 1024, %s198, [#allocation7], 64, 64, 4
        $region16: #{tpu_custom_call.1} parent=11 // pred_fallthru
          _
        // Predicated region
        $region17: #{tpu_custom_call.1} parent=11 // pred_check
          %p204 = pneg %p105
        $region18: #{tpu_custom_call.1} parent=11 // pred_check_branch
          %206 = sbr.rel (%p204) target = $region20
        $region19: #{tpu_custom_call.1} parent=11 // pred_region
          _
        $region20: #{tpu_custom_call.1} parent=11 // pred_fallthru
          _
        // Predicated region
        $region21: #{tpu_custom_call.1} parent=11 // pred_check
          %p207 = pneg %p126
        $region22: #{tpu_custom_call.1} parent=11 // pred_check_branch
          %209 = sbr.rel (%p207) target = $region24
        $region23: #{tpu_custom_call.1} parent=11 // pred_region
          %s211 = ssub.s32 1024, 1024
          %212 = vsyncadd [#allocation7], %s211
          %s213 = sshll.u32 [#allocation8], 4
          %s214 = int_to_ptr.vmem [resolvable:$true] %s213
          %219 = dma.hbm_to_vmem [thread:$0]  %s3, 1024, %s214, [#allocation7], 64, 64, 4
        $region24: #{tpu_custom_call.1} parent=11 // pred_fallthru
          _
        // Predicated region
        $region25: #{tpu_custom_call.1} parent=11 // pred_check
          %p220 = pneg %p147
        $region26: #{tpu_custom_call.1} parent=11 // pred_check_branch
          %222 = sbr.rel (%p220) target = $region28
        $region27: #{tpu_custom_call.1} parent=11 // pred_region
          _
        $region28: #{tpu_custom_call.1} parent=11 // pred_fallthru
          _
      $region12: #{tpu_custom_call.1} parent=5 // pred_fallthru
        _
      %p223 = scmp.lt.s32.totalorder %s18, 2
      // Predicated region
      $region29: #{tpu_custom_call.1} parent=5 // pred_check
        %p224 = pneg %p223
      $region30: #{tpu_custom_call.1} parent=5 // pred_check_branch
        %226 = sbr.rel (%p224) target = $region32
      $region31: #{tpu_custom_call.1} parent=5 // pred_region
        // Predicated region
        $region33: #{tpu_custom_call.1} parent=31 // pred_check
          %p227 = pneg %p52
        $region34: #{tpu_custom_call.1} parent=31 // pred_check_branch
          %229 = sbr.rel (%p227) target = $region36
        $region35: #{tpu_custom_call.1} parent=31 // pred_region
          %s230 = sand.u32 %s42, 1
          %s231 = scalar_lea.sflag [#allocation4], %s230
          %s232 = sand.u32 %s42, 1
          %s233 = smul.addr %s232, 32
          %s234 = scalar_lea.vmem [#allocation3], %s233
          %s235 = smul.u32 8, %s25
          %s237 = ssub.s32 512, 512
          %238 = vsyncadd %s231, %s237
          %s239 = sadd.s32 %s26, %s235
          %s240 = smul.addr %s239, 64
          %s241 = scalar_lea.hbm %s0, %s240
          %s242 = sshll.u32 %s234, 4
          %s243 = int_to_ptr.vmem [resolvable:$true] %s242
          %248 = dma.hbm_to_vmem [thread:$0]  %s241, 512, %s243, %s231, 64, 64, 4
        $region36: #{tpu_custom_call.1} parent=31 // pred_fallthru
          _
      $region32: #{tpu_custom_call.1} parent=5 // pred_fallthru
        _
      %p249 = scmp.le.s32.totalorder 1, %s18
      %p250 = scmp.lt.s32.totalorder %s18, 3
      %p251 = pnand %p249, %p250
      %p252 = pneg %p251
      // Predicated region
      $region37: #{tpu_custom_call.1} parent=5 // pred_check
        _
      $region38: #{tpu_custom_call.1} parent=5 // pred_check_branch
        %254 = sbr.rel (%p251) target = $region40
      $region39: #{tpu_custom_call.1} parent=5 // pred_region
        %s255 = ssub.s32 %s18, 1
        %s256 = sand.u32 %s45, 1
        %s257 = scalar_lea.sflag [#allocation4], %s256
        %s258 = sand.u32 %s45, 1
        %s259 = smul.addr %s258, 32
        %s260 = scalar_lea.vmem [#allocation3], %s259
        // Predicated region
        $region41: #{tpu_custom_call.1} parent=39 // pred_check
          %p261 = pneg %p58
        $region42: #{tpu_custom_call.1} parent=39 // pred_check_branch
          %263 = sbr.rel (%p261) target = $region44
        $region43: #{tpu_custom_call.1} parent=39 // pred_region
          %264 = dma.done %s257, 512
        $region44: #{tpu_custom_call.1} parent=39 // pred_fallthru
          _
        // Predicated region
        $region45: #{tpu_custom_call.1} parent=39 // pred_check
          %p265 = pneg %p84
        $region46: #{tpu_custom_call.1} parent=39 // pred_check_branch
          %267 = sbr.rel (%p265) target = $region48
        $region47: #{tpu_custom_call.1} parent=39 // pred_region
          %268 = dma.done [#allocation7], 1024
        $region48: #{tpu_custom_call.1} parent=39 // pred_fallthru
          _
        // Predicated region
        $region49: #{tpu_custom_call.1} parent=39 // pred_check
          %p269 = pneg %p126
        $region50: #{tpu_custom_call.1} parent=39 // pred_check_branch
          %271 = sbr.rel (%p269) target = $region52
        $region51: #{tpu_custom_call.1} parent=39 // pred_region
          %272 = dma.done [#allocation7], 1024
        $region52: #{tpu_custom_call.1} parent=39 // pred_fallthru
          _
        %s273 = sand.u32 %s45, 1
        %s274 = scalar_lea.sflag [#allocation4], %s273
        %s275 = sand.u32 %s45, 1
        %s276 = smul.addr %s275, 32
        %s277 = scalar_lea.vmem [#allocation3], %s276
        %p278 = pneg %p58
        %p279 = pneg %p55
        %p280 = pneg %p84
        %p281 = pneg %p81
        %p282 = pneg %p105
        %p283 = pneg %p102
        %p284 = pneg %p126
        %p285 = pneg %p123
        %p286 = pneg %p147
        %p287 = pneg %p144
        %p288 = pneg %p173
        %p289 = pneg %p170
        %s290 = sand.u32 %s160, 1
        %s291 = scalar_lea.sflag [#allocation5], %s290
        %s292 = sand.u32 %s160, 1
        %s293 = smul.addr %s292, 64
        %s294 = scalar_lea.vmem [#allocation9], %s293
        %s295 = smul.u32 8, %s27
        %s296 = smul.u32 16, %s28
        %s297 = smul.u32 8, %s27
        %p299 = scmp.eq.s32.totalorder %s28, 0
        // Predicated region
        $region53: #{tpu_custom_call.1} parent=39 // pred_check
          %p300 = pneg %p299
        $region54: #{tpu_custom_call.1} parent=39 // pred_check_branch
          %302 = sbr.rel (%p300) target = $region56
        $region55: #{tpu_custom_call.1} parent=39 // pred_region
          %303 = vst [vmem:[#allocation2] sm:$0xff] 0.0
          %304 = vst [vmem:[#allocation2 + $0x8] sm:$0xff] 0.0
          %305 = vst [vmem:[#allocation2 + $0x10] sm:$0xff] 0.0
          %306 = vst [vmem:[#allocation2 + $0x18] sm:$0xff] 0.0
          %307 = vst [vmem:[#allocation2 + $0x20] sm:$0xff] 0.0
          %308 = vst [vmem:[#allocation2 + $0x28] sm:$0xff] 0.0
          %309 = vst [vmem:[#allocation2 + $0x30] sm:$0xff] 0.0
          %310 = vst [vmem:[#allocation2 + $0x38] sm:$0xff] 0.0
        $region56: #{tpu_custom_call.1} parent=39 // pred_fallthru
          _
        %v311 = vld [vmem:[#allocation2] sm:$0xff]
        %v312 = vld [vmem:[#allocation2 + $0x8] sm:$0xff]
        %v313 = vld [vmem:[#allocation2 + $0x10] sm:$0xff]
        %v314 = vld [vmem:[#allocation2 + $0x18] sm:$0xff]
        %v315 = vld [vmem:[#allocation2 + $0x20] sm:$0xff]
        %v316 = vld [vmem:[#allocation2 + $0x28] sm:$0xff]
        %v317 = vld [vmem:[#allocation2 + $0x30] sm:$0xff]
        %v318 = vld [vmem:[#allocation2 + $0x38] sm:$0xff]
        %v319 = vld [vmem:[%s260] sm:$0xf]
        %v320 = vld [vmem:[%s260 + $0x4] sm:$0xf]
        %v321 = vld [vmem:[%s260 + $0x8] sm:$0xf]
        %v322 = vld [vmem:[%s260 + $0xc] sm:$0xf]
        %v323 = vld [vmem:[%s260 + $0x10] sm:$0xf]
        %v324 = vld [vmem:[%s260 + $0x14] sm:$0xf]
        %v325 = vld [vmem:[%s260 + $0x18] sm:$0xf]
        %v326 = vld [vmem:[%s260 + $0x1c] sm:$0xf]
        %v327 = vld [vmem:[#allocation6] sm:$0xf]
        %v328 = vld [vmem:[#allocation6 + $0x4] sm:$0xf]
        %v329 = vld [vmem:[#allocation6 + $0x8] sm:$0xf]
        %v330 = vld [vmem:[#allocation6 + $0xc] sm:$0xf]
        %v331 = vld [vmem:[#allocation6 + $0x10] sm:$0xf]
        %v332 = vld [vmem:[#allocation6 + $0x14] sm:$0xf]
        %v333 = vld [vmem:[#allocation6 + $0x18] sm:$0xf]
        %v334 = vld [vmem:[#allocation6 + $0x1c] sm:$0xf]
        %v335 = vld [vmem:[#allocation6 + $0x20] sm:$0xf]
        %v336 = vld [vmem:[#allocation6 + $0x24] sm:$0xf]
        %v337 = vld [vmem:[#allocation6 + $0x28] sm:$0xf]
        %v338 = vld [vmem:[#allocation6 + $0x2c] sm:$0xf]
        %v339 = vld [vmem:[#allocation6 + $0x30] sm:$0xf]
        %v340 = vld [vmem:[#allocation6 + $0x34] sm:$0xf]
        %v341 = vld [vmem:[#allocation6 + $0x38] sm:$0xf]
        %v342 = vld [vmem:[#allocation6 + $0x3c] sm:$0xf]
        %v351 = vunpack.c.l.b16 %v319
        %v352 = vunpack.c.l.b16 %v320
        %v353 = vunpack.c.l.b16 %v321
        %v354 = vunpack.c.l.b16 %v322
        %v355 = vunpack.c.l.b16 %v323
        %v356 = vunpack.c.l.b16 %v324
        %v357 = vunpack.c.l.b16 %v325
        %v358 = vunpack.c.l.b16 %v326
        %v359 = vpack.c.b16 %v352, %v351
        %v360 = vpack.c.b16 %v354, %v353
        %v361 = vpack.c.b16 %v356, %v355
        %v362 = vpack.c.b16 %v358, %v357
        %v383 = vunpack.c.l.b16 %v327
        %v384 = vunpack.c.l.b16 %v328
        %v385 = vunpack.c.l.b16 %v329
        %v386 = vunpack.c.l.b16 %v330
        %v387 = vunpack.c.l.b16 %v331
        %v388 = vunpack.c.l.b16 %v332
        %v389 = vunpack.c.l.b16 %v333
        %v390 = vunpack.c.l.b16 %v334
        %v391 = vunpack.c.l.b16 %v335
        %v392 = vunpack.c.l.b16 %v336
        %v393 = vunpack.c.l.b16 %v337
        %v394 = vunpack.c.l.b16 %v338
        %v395 = vunpack.c.l.b16 %v339
        %v396 = vunpack.c.l.b16 %v340
        %v397 = vunpack.c.l.b16 %v341
        %v398 = vunpack.c.l.b16 %v342
        %v399 = vpack.c.b16 %v384, %v383
        %v400 = vpack.c.b16 %v386, %v385
        %v401 = vpack.c.b16 %v388, %v387
        %v402 = vpack.c.b16 %v390, %v389
        %v403 = vpack.c.b16 %v392, %v391
        %v404 = vpack.c.b16 %v394, %v393
        %v405 = vpack.c.b16 %v396, %v395
        %v406 = vpack.c.b16 %v398, %v397
        %415 = vmatprep.subr.bf16.mxu0 0
        %416 = vmatpush1.bf16.msra.mxu0 %v399
        %417 = vmatprep.subr.bf16.mxu0 0
        %418 = vmatpush1.bf16.msra.mxu0 %v400
        %419 = vmatprep.subr.bf16.mxu0 0
        %420 = vmatpush1.bf16.msra.mxu0 %v401
        %421 = vmatprep.subr.bf16.mxu0 0
        %422 = vmatpush1.bf16.msra.mxu0 %v402
        %423 = vmatprep.subr.bf16.mxu0 0
        %424 = vmatpush1.bf16.msra.mxu0 %v403
        %425 = vmatprep.subr.bf16.mxu0 0
        %426 = vmatpush1.bf16.msra.mxu0 %v404
        %427 = vmatprep.subr.bf16.mxu0 0
        %428 = vmatpush1.bf16.msra.mxu0 %v405
        %429 = vmatprep.subr.bf16.mxu0 0
        %430 = vmatpush1.bf16.msra.mxu0 %v406
        %431 = vmatprep.subr.bf16.mxu0 0
        %432 = vmatpush1.bf16.msra.mxu0 0
        %433 = vmatprep.subr.bf16.mxu0 0
        %434 = vmatpush1.bf16.msra.mxu0 0
        %435 = vmatprep.subr.bf16.mxu0 0
        %436 = vmatpush1.bf16.msra.mxu0 0
        %437 = vmatprep.subr.bf16.mxu0 0
        %438 = vmatpush1.bf16.msra.mxu0 0
        %439 = vmatprep.subr.bf16.mxu0 0
        %440 = vmatpush1.bf16.msra.mxu0 0
        %441 = vmatprep.subr.bf16.mxu0 0
        %442 = vmatpush1.bf16.msra.mxu0 0
        %443 = vmatprep.subr.bf16.mxu0 0
        %444 = vmatpush1.bf16.msra.mxu0 0
        %445 = vmatprep.subr.bf16.mxu0 0
        %446 = vmatpush1.bf16.msra.mxu0 0
        %447 = vmatprep.mubr.bf16.mxu0 0
        %448 = vmatmul.mubr.bf16.gmra.mrb[0].mxu0 %v359
        %v449 = vpop.f32.mrb[0].mxu0
        %v450 = vadd.f32 0.0, %v449
        %v451 = vpop.f32.mrb[0].mxu0
        %v452 = vpop.f32.mrb[0].mxu0
        %v453 = vadd.f32 0.0, %v452
        %v454 = vpop.f32.mrb[0].mxu0
        %455 = vmatprep.mubr.bf16.mxu0 0
        %456 = vmatmul.mubr.bf16.gmra.mrb[0].mxu0 %v360
        %v457 = vpop.f32.mrb[0].mxu0
        %v458 = vadd.f32 0.0, %v457
        %v459 = vpop.f32.mrb[0].mxu0
        %v460 = vpop.f32.mrb[0].mxu0
        %v461 = vadd.f32 0.0, %v460
        %v462 = vpop.f32.mrb[0].mxu0
        %463 = vmatprep.mubr.bf16.mxu0 0
        %464 = vmatmul.mubr.bf16.gmra.mrb[0].mxu0 %v361
        %v465 = vpop.f32.mrb[0].mxu0
        %v466 = vadd.f32 0.0, %v465
        %v467 = vpop.f32.mrb[0].mxu0
        %v468 = vpop.f32.mrb[0].mxu0
        %v469 = vadd.f32 0.0, %v468
        %v470 = vpop.f32.mrb[0].mxu0
        %471 = vmatprep.mubr.bf16.mxu0 0
        %472 = vmatmul.mubr.bf16.gmra.mrb[0].mxu0 %v362
        %v473 = vpop.f32.mrb[0].mxu0
        %v474 = vadd.f32 0.0, %v473
        %v475 = vpop.f32.mrb[0].mxu0
        %v476 = vpop.f32.mrb[0].mxu0
        %v477 = vadd.f32 0.0, %v476
        %v478 = vpop.f32.mrb[0].mxu0
        %479 = vdwg.mxu0
        %v480 = vadd.f32 %v311, %v450
        %v481 = vadd.f32 %v312, %v453
        %v482 = vadd.f32 %v313, %v458
        %v483 = vadd.f32 %v314, %v461
        %v484 = vadd.f32 %v315, %v466
        %v485 = vadd.f32 %v316, %v469
        %v486 = vadd.f32 %v317, %v474
        %v487 = vadd.f32 %v318, %v477
        %488 = vst [vmem:[#allocation2] sm:$0xff] %v480
        %489 = vst [vmem:[#allocation2 + $0x8] sm:$0xff] %v481
        %490 = vst [vmem:[#allocation2 + $0x10] sm:$0xff] %v482
        %491 = vst [vmem:[#allocation2 + $0x18] sm:$0xff] %v483
        %492 = vst [vmem:[#allocation2 + $0x20] sm:$0xff] %v484
        %493 = vst [vmem:[#allocation2 + $0x28] sm:$0xff] %v485
        %494 = vst [vmem:[#allocation2 + $0x30] sm:$0xff] %v486
        %495 = vst [vmem:[#allocation2 + $0x38] sm:$0xff] %v487
        // Predicated region
        $region57: #{tpu_custom_call.1} parent=39 // pred_check
          %p496 = pneg %p299
        $region58: #{tpu_custom_call.1} parent=39 // pred_check_branch
          %498 = sbr.rel (%p496) target = $region60
        $region59: #{tpu_custom_call.1} parent=39 // pred_region
          %v499 = vld [vmem:[#allocation2] sm:$0xff]
          %v500 = vld [vmem:[#allocation2 + $0x8] sm:$0xff]
          %v501 = vld [vmem:[#allocation2 + $0x10] sm:$0xff]
          %v502 = vld [vmem:[#allocation2 + $0x18] sm:$0xff]
          %v503 = vld [vmem:[#allocation2 + $0x20] sm:$0xff]
          %v504 = vld [vmem:[#allocation2 + $0x28] sm:$0xff]
          %v505 = vld [vmem:[#allocation2 + $0x30] sm:$0xff]
          %v506 = vld [vmem:[#allocation2 + $0x38] sm:$0xff]
          %v507 = vld [vmem:[%s2] sm:$0x1]
          %v509 = vlaneseq
          %v510 = vshrl.u32 %v509, 7
          %v511 = vsub.s32 0, %v510
          %v512 = vrot.slane %v507, %v511
          %v514 = vadd.f32 %v499, %v512
          %v515 = vadd.f32 %v500, %v512
          %v516 = vadd.f32 %v501, %v512
          %v517 = vadd.f32 %v502, %v512
          %v518 = vadd.f32 %v503, %v512
          %v519 = vadd.f32 %v504, %v512
          %v520 = vadd.f32 %v505, %v512
          %v521 = vadd.f32 %v506, %v512
          %v522 = vmax.f32 %v514, 0.0
          %v523 = vmax.f32 %v515, 0.0
          %v524 = vmax.f32 %v516, 0.0
          %v525 = vmax.f32 %v517, 0.0
          %v526 = vmax.f32 %v518, 0.0
          %v527 = vmax.f32 %v519, 0.0
          %v528 = vmax.f32 %v520, 0.0
          %v529 = vmax.f32 %v521, 0.0
          %v530 = vpack.c.bf16 %v523, %v522
          %v531 = vpack.c.bf16 %v525, %v524
          %v532 = vpack.c.bf16 %v527, %v526
          %v533 = vpack.c.bf16 %v529, %v528
          %v534 = vld [vmem:[#allocation8] sm:$0xf]
          %v535 = vld [vmem:[#allocation8 + $0x4] sm:$0xf]
          %v536 = vld [vmem:[#allocation8 + $0x8] sm:$0xf]
          %v537 = vld [vmem:[#allocation8 + $0xc] sm:$0xf]
          %v538 = vld [vmem:[#allocation8 + $0x10] sm:$0xf]
          %v539 = vld [vmem:[#allocation8 + $0x14] sm:$0xf]
          %v540 = vld [vmem:[#allocation8 + $0x18] sm:$0xf]
          %v541 = vld [vmem:[#allocation8 + $0x1c] sm:$0xf]
          %v542 = vld [vmem:[#allocation8 + $0x20] sm:$0xf]
          %v543 = vld [vmem:[#allocation8 + $0x24] sm:$0xf]
          %v544 = vld [vmem:[#allocation8 + $0x28] sm:$0xf]
          %v545 = vld [vmem:[#allocation8 + $0x2c] sm:$0xf]
          %v546 = vld [vmem:[#allocation8 + $0x30] sm:$0xf]
          %v547 = vld [vmem:[#allocation8 + $0x34] sm:$0xf]
          %v548 = vld [vmem:[#allocation8 + $0x38] sm:$0xf]
          %v549 = vld [vmem:[#allocation8 + $0x3c] sm:$0xf]
          %v550 = vld [vmem:[%s4] sm:$0x1]
          %v552 = vlaneseq
          %v553 = vshrl.u32 %v552, 7
          %v554 = vsub.s32 0, %v553
          %v555 = vrot.slane %v550, %v554
          %v573 = vunpack.c.l.b16 %v534
          %v574 = vunpack.c.l.b16 %v535
          %v575 = vunpack.c.l.b16 %v536
          %v576 = vunpack.c.l.b16 %v537
          %v577 = vunpack.c.l.b16 %v538
          %v578 = vunpack.c.l.b16 %v539
          %v579 = vunpack.c.l.b16 %v540
          %v580 = vunpack.c.l.b16 %v541
          %v581 = vunpack.c.l.b16 %v542
          %v582 = vunpack.c.l.b16 %v543
          %v583 = vunpack.c.l.b16 %v544
          %v584 = vunpack.c.l.b16 %v545
          %v585 = vunpack.c.l.b16 %v546
          %v586 = vunpack.c.l.b16 %v547
          %v587 = vunpack.c.l.b16 %v548
          %v588 = vunpack.c.l.b16 %v549
          %v589 = vpack.c.b16 %v574, %v573
          %v590 = vpack.c.b16 %v576, %v575
          %v591 = vpack.c.b16 %v578, %v577
          %v592 = vpack.c.b16 %v580, %v579
          %v593 = vpack.c.b16 %v582, %v581
          %v594 = vpack.c.b16 %v584, %v583
          %v595 = vpack.c.b16 %v586, %v585
          %v596 = vpack.c.b16 %v588, %v587
          %605 = vmatprep.subr.bf16.mxu0 0
          %606 = vmatpush1.bf16.msra.mxu0 %v589
          %607 = vmatprep.subr.bf16.mxu0 0
          %608 = vmatpush1.bf16.msra.mxu0 %v590
          %609 = vmatprep.subr.bf16.mxu0 0
          %610 = vmatpush1.bf16.msra.mxu0 %v591
          %611 = vmatprep.subr.bf16.mxu0 0
          %612 = vmatpush1.bf16.msra.mxu0 %v592
          %613 = vmatprep.subr.bf16.mxu0 0
          %614 = vmatpush1.bf16.msra.mxu0 %v593
          %615 = vmatprep.subr.bf16.mxu0 0
          %616 = vmatpush1.bf16.msra.mxu0 %v594
          %617 = vmatprep.subr.bf16.mxu0 0
          %618 = vmatpush1.bf16.msra.mxu0 %v595
          %619 = vmatprep.subr.bf16.mxu0 0
          %620 = vmatpush1.bf16.msra.mxu0 %v596
          %621 = vmatprep.subr.bf16.mxu0 0
          %622 = vmatpush1.bf16.msra.mxu0 0
          %623 = vmatprep.subr.bf16.mxu0 0
          %624 = vmatpush1.bf16.msra.mxu0 0
          %625 = vmatprep.subr.bf16.mxu0 0
          %626 = vmatpush1.bf16.msra.mxu0 0
          %627 = vmatprep.subr.bf16.mxu0 0
          %628 = vmatpush1.bf16.msra.mxu0 0
          %629 = vmatprep.subr.bf16.mxu0 0
          %630 = vmatpush1.bf16.msra.mxu0 0
          %631 = vmatprep.subr.bf16.mxu0 0
          %632 = vmatpush1.bf16.msra.mxu0 0
          %633 = vmatprep.subr.bf16.mxu0 0
          %634 = vmatpush1.bf16.msra.mxu0 0
          %635 = vmatprep.subr.bf16.mxu0 0
          %636 = vmatpush1.bf16.msra.mxu0 0
          %637 = vmatprep.mubr.bf16.mxu0 0
          %638 = vmatmul.mubr.bf16.gmra.mrb[0].mxu0 %v530
          %v639 = vpop.f32.mrb[0].mxu0
          %v640 = vadd.f32 %v555, %v639
          %v641 = vpop.f32.mrb[0].mxu0
          %v642 = vpop.f32.mrb[0].mxu0
          %v643 = vadd.f32 %v555, %v642
          %v644 = vpop.f32.mrb[0].mxu0
          %645 = vmatprep.mubr.bf16.mxu0 0
          %646 = vmatmul.mubr.bf16.gmra.mrb[0].mxu0 %v531
          %v647 = vpop.f32.mrb[0].mxu0
          %v648 = vadd.f32 %v555, %v647
          %v649 = vpop.f32.mrb[0].mxu0
          %v650 = vpop.f32.mrb[0].mxu0
          %v651 = vadd.f32 %v555, %v650
          %v652 = vpop.f32.mrb[0].mxu0
          %653 = vmatprep.mubr.bf16.mxu0 0
          %654 = vmatmul.mubr.bf16.gmra.mrb[0].mxu0 %v532
          %v655 = vpop.f32.mrb[0].mxu0
          %v656 = vadd.f32 %v555, %v655
          %v657 = vpop.f32.mrb[0].mxu0
          %v658 = vpop.f32.mrb[0].mxu0
          %v659 = vadd.f32 %v555, %v658
          %v660 = vpop.f32.mrb[0].mxu0
          %661 = vmatprep.mubr.bf16.mxu0 0
          %662 = vmatmul.mubr.bf16.gmra.mrb[0].mxu0 %v533
          %v663 = vpop.f32.mrb[0].mxu0
          %v664 = vadd.f32 %v555, %v663
          %v665 = vpop.f32.mrb[0].mxu0
          %v666 = vpop.f32.mrb[0].mxu0
          %v667 = vadd.f32 %v555, %v666
          %v668 = vpop.f32.mrb[0].mxu0
          %669 = vdwg.mxu0
          %670 = vst [vmem:[%s294] sm:$0xff] %v640
          %671 = vst [vmem:[%s294 + $0x8] sm:$0xff] %v643
          %672 = vst [vmem:[%s294 + $0x10] sm:$0xff] %v648
          %673 = vst [vmem:[%s294 + $0x18] sm:$0xff] %v651
          %674 = vst [vmem:[%s294 + $0x20] sm:$0xff] %v656
          %675 = vst [vmem:[%s294 + $0x28] sm:$0xff] %v659
          %676 = vst [vmem:[%s294 + $0x30] sm:$0xff] %v664
          %677 = vst [vmem:[%s294 + $0x38] sm:$0xff] %v667
        $region60: #{tpu_custom_call.1} parent=39 // pred_fallthru
          _
        %s678 = sand.u32 %s160, 1
        %s679 = scalar_lea.sflag [#allocation5], %s678
        %s680 = sand.u32 %s160, 1
        %s681 = smul.addr %s680, 64
        %s682 = scalar_lea.vmem [#allocation9], %s681
        // Predicated region
        $region61: #{tpu_custom_call.1} parent=39 // pred_check
          %p683 = pneg %p170
        $region62: #{tpu_custom_call.1} parent=39 // pred_check_branch
          %685 = sbr.rel (%p683) target = $region64
        $region63: #{tpu_custom_call.1} parent=39 // pred_region
          %s686 = smul.u32 8, %s27
          %s688 = ssub.s32 1024, 1024
          %689 = vsyncadd %s679, %s688
          %s690 = smul.addr %s686, 128
          %s691 = scalar_lea.hbm %s5, %s690
          %s692 = sshll.u32 %s682, 4
          %s693 = int_to_ptr.vmem [resolvable:$true] %s692
          %698 = dma.vmem_to_hbm [thread:$0]  %s693, 1024, %s691, %s679, 128, 128, 8
        $region64: #{tpu_custom_call.1} parent=39 // pred_fallthru
          _
      $region40: #{tpu_custom_call.1} parent=5 // pred_fallthru
        _
      %p699 = scmp.le.s32.totalorder 2, %s18
      // Predicated region
      $region65: #{tpu_custom_call.1} parent=5 // pred_check
        %p700 = pneg %p699
      $region66: #{tpu_custom_call.1} parent=5 // pred_check_branch
        %702 = sbr.rel (%p700) target = $region68
      $region67: #{tpu_custom_call.1} parent=5 // pred_region
        %s703 = ssub.s32 %s18, 2
        // Predicated region
        $region69: #{tpu_custom_call.1} parent=67 // pred_check
          %p704 = pneg %p176
        $region70: #{tpu_custom_call.1} parent=67 // pred_check_branch
          %706 = sbr.rel (%p704) target = $region72
        $region71: #{tpu_custom_call.1} parent=67 // pred_region
          %s707 = sand.u32 %s161, 1
          %s708 = scalar_lea.sflag [#allocation5], %s707
          %s709 = sand.u32 %s161, 1
          %s710 = smul.addr %s709, 64
          %s711 = scalar_lea.vmem [#allocation9], %s710
          %712 = dma.done %s708, 1024
        $region72: #{tpu_custom_call.1} parent=67 // pred_fallthru
          _
      $region68: #{tpu_custom_call.1} parent=5 // pred_fallthru
        _
    $region6: #{tpu_custom_call.1} parent=1 // loop_footer
      %s22 = sadd.s32 1, %s18
    $region7: #{tpu_custom_call.1} parent=1 // loop_footer_branch
      %17 = sbr.rel target = $region3
    $region8: #{tpu_custom_call.1} parent=1 // loop_exit
      _
    %713 = vsyncpa [#allocation4], 1
    %s714 = scalar_lea.sflag [#allocation4], 1
    %715 = vsyncpa %s714, 1
    %716 = vsyncpa [#allocation7], 1
    %717 = vsyncpa [#allocation5], 1
    %s718 = scalar_lea.sflag [#allocation5], 1
    %719 = vsyncpa %s718, 1

</llo_original>
